<compile_context>
chip_gen: v6e
topology: v6e:2x2x1
jax: 0.10.0
libtpu: 0.0.40
codegen_flags: <defaults>
</compile_context>

<pallas_src>
import jax
import jax.numpy as jnp
from jax import lax
from jax.experimental import pallas as pl
from jax.experimental.pallas import tpu as pltpu


def _round_up(n, m):
    return ((n + m - 1) // m) * m


def rnn_kernel(xw_ref, w_hh_ref, w_fc_ref, b_fc_ref, out_ref):
    seq_len, bt, hid = xw_ref.shape

    # Recurrent weight resident in VMEM/vregs (bf16) across all timesteps.
    w_hh = w_hh_ref[...]

    def step(t, h):
        # xw slice loaded from the VMEM input block each step; h stays in vregs.
        pre = xw_ref[t] + jnp.dot(h.astype(jnp.bfloat16), w_hh,
                                  preferred_element_type=jnp.float32)
        return jnp.tanh(pre)

    h0 = jnp.zeros((bt, hid), jnp.float32)
    h = lax.fori_loop(0, seq_len, step, h0, unroll=min(seq_len, 8))

    # Final Linear on the last hidden state; lane-dense (padded) output store.
    out_ref[...] = (jnp.dot(h, w_fc_ref[...], preferred_element_type=jnp.float32)
                    + b_fc_ref[...]).astype(out_ref.dtype)


def rnn_forward(text, params):
    """text: (seq_len, batch) int32.  Returns (batch, output_dim) float32."""
    emb_table, w_ih, w_hh, b_ih, b_hh, w_fc, b_fc = params
    seq_len, batch = text.shape
    hidden_dim = w_hh.shape[0]
    out_dim = w_fc.shape[0]

    hid_p = _round_up(hidden_dim, 128)
    out_p = _round_up(out_dim, 128)

    # Wide batch tile to feed the MXU rows; cap at 256 and by a VMEM budget
    # for the double-buffered per-block xw tile (v7x scoped VMEM is smaller).
    batch_tile = min(_round_up(batch, 8), 256)
    vmem_budget = 24 * 1024 * 1024
    while batch_tile > 8 and 2 * seq_len * batch_tile * hid_p * 4 > vmem_budget:
        batch_tile //= 2
    batch_tile = max(8, _round_up(batch_tile, 8))
    batch_p = _round_up(batch, batch_tile)
    # TODO(synk): for very long sequences add an "arbitrary" seq-chunk grid axis
    # (h carried in a VMEM scratch, pl.when-init at chunk 0), and on v7x keep
    # >= 2 parallel batch shards when the batch is large enough to engage both
    # TensorCores.

    # Fold W_ih + (b_ih + b_hh) into the embedding table (exact), then gather
    # the pre-projected inputs: xw[t] = emb[text[t]] @ W_ih^T + b.
    xw_table = emb_table @ w_ih.T + (b_ih + b_hh)                 # (vocab, hid)
    xw_table = jnp.pad(xw_table, ((0, 0), (0, hid_p - hidden_dim)))
    text_pad = jnp.pad(text, ((0, 0), (0, batch_p - batch)))
    xw = jnp.take(xw_table, text_pad, axis=0).astype(jnp.float32)  # (seq, batch_p, hid_p)

    # Recurrent weight in bf16 (single-pass MXU on the serial chain); final
    # Linear weight/bias in f32 (once per call, off the critical path).
    w_hh_t = jnp.pad(w_hh.T, ((0, hid_p - hidden_dim),) * 2).astype(jnp.bfloat16)
    w_fc_t = jnp.pad(w_fc.T, ((0, hid_p - hidden_dim), (0, out_p - out_dim)))
    b_fc_r = jnp.pad(b_fc, (0, out_p - out_dim)).reshape(1, out_p)

    grid = (batch_p // batch_tile,)                                # parallel batch shards
    out = pl.pallas_call(
        rnn_kernel,
        out_shape=jax.ShapeDtypeStruct((batch_p, out_p), jnp.float32),
        grid_spec=pltpu.PrefetchScalarGridSpec(
            num_scalar_prefetch=0,
            grid=grid,
            in_specs=[
                pl.BlockSpec((seq_len, batch_tile, hid_p), lambda b: (0, b, 0)),
                pl.BlockSpec((hid_p, hid_p), lambda b: (0, 0)),
                pl.BlockSpec((hid_p, out_p), lambda b: (0, 0)),
                pl.BlockSpec((1, out_p), lambda b: (0, 0)),
            ],
            out_specs=pl.BlockSpec((batch_tile, out_p), lambda b: (b, 0)),
        ),
        compiler_params=pltpu.CompilerParams(
            dimension_semantics=("parallel",)),
    )(xw, w_hh_t, w_fc_t, b_fc_r)

    return out[:batch, :out_dim]


def make_params(key, input_dim, embedding_dim, hidden_dim, output_dim):
    ks = jax.random.split(key, 7)
    emb_table = jax.random.normal(ks[0], (input_dim, embedding_dim), jnp.float32)
    scale_r = 1.0 / jnp.sqrt(hidden_dim)
    w_ih = jax.random.uniform(ks[1], (hidden_dim, embedding_dim),
                              jnp.float32, -scale_r, scale_r)
    w_hh = jax.random.uniform(ks[2], (hidden_dim, hidden_dim),
                              jnp.float32, -scale_r, scale_r)
    b_ih = jax.random.uniform(ks[3], (hidden_dim,), jnp.float32, -scale_r, scale_r)
    b_hh = jax.random.uniform(ks[4], (hidden_dim,), jnp.float32, -scale_r, scale_r)
    scale_f = 1.0 / jnp.sqrt(hidden_dim)
    w_fc = jax.random.uniform(ks[5], (output_dim, hidden_dim),
                              jnp.float32, -scale_f, scale_f)
    b_fc = jax.random.uniform(ks[6], (output_dim,), jnp.float32, -scale_f, scale_f)
    return emb_table, w_ih, w_hh, b_ih, b_hh, w_fc, b_fc


def rnn_reference(text, params):
    """Pure-JAX f32 reference mirroring the PyTorch forward."""
    emb_table, w_ih, w_hh, b_ih, b_hh, w_fc, b_fc = params
    embedded = jnp.take(emb_table, text, axis=0)          # (seq, batch, emb)
    batch = text.shape[1]
    hidden_dim = w_hh.shape[0]

    def step(h, x_t):
        h_new = jnp.tanh(x_t @ w_ih.T + b_ih + h @ w_hh.T + b_hh)
        return h_new, h_new

    h0 = jnp.zeros((batch, hidden_dim), jnp.float32)
    h_last, _ = jax.lax.scan(step, h0, embedded)
    return h_last @ w_fc.T + b_fc


if __name__ == "__main__":
    input_dim = 32       # vocab size
    embedding_dim = 16
    hidden_dim = 32
    output_dim = 8
    seq_len = 8
    batch = 4

    key = jax.random.PRNGKey(0)
    pkey, tkey = jax.random.split(key)
    params = make_params(pkey, input_dim, embedding_dim, hidden_dim, output_dim)
    text = jax.random.randint(tkey, (seq_len, batch), 0, input_dim, jnp.int32)

    out = rnn_forward(text, params)
    jax.block_until_ready(out)

    ref = rnn_reference(text, params)
    assert out.shape == (batch, output_dim)
    # bf16 recurrent matmul (f32 accumulation) -> ~1e-2-level expected error
    # vs the pure-f32 reference.
    assert jnp.allclose(out, ref, atol=5e-2, rtol=5e-2), \
        f"max err {jnp.max(jnp.abs(out - ref))}"
    print("KERNEL_OK")
</pallas_src>

<mosaic_0001>
module attributes {stable_mosaic.version = 11 : i64} {
  func.func @rnn_kernel(%arg0: i32, %arg1: memref<8x8x128xf32, #tpu.memory_space<vmem>>, %arg2: memref<128x128xbf16, #tpu.memory_space<vmem>>, %arg3: memref<128x128xf32, #tpu.memory_space<vmem>>, %arg4: memref<1x128xf32, #tpu.memory_space<vmem>>, %arg5: memref<8x128xf32, #tpu.memory_space<vmem>>) attributes {dimension_semantics = [#tpu.dimension_semantics<parallel>], iteration_bounds = array<i64: 1>, scalar_prefetch = 0 : i64, scratch_operands = 0 : i64, tpu.core_type = #tpu.core_type<tc>, window_params = [{transform_indices = @transform_0, window_bounds = array<i64: 8, 8, 128>}, {pipeline_mode = #tpu.pipeline_mode<synchronous>, transform_indices = @transform_1, window_bounds = array<i64: 128, 128>}, {pipeline_mode = #tpu.pipeline_mode<synchronous>, transform_indices = @transform_2, window_bounds = array<i64: 128, 128>}, {pipeline_mode = #tpu.pipeline_mode<synchronous>, transform_indices = @transform_3, window_bounds = array<i64: 1, 128>}, {transform_indices = @transform_4, window_bounds = array<i64: 8, 128>}]} {
    %c0 = arith.constant 0 : index
    %c0_0 = arith.constant 0 : index
    %0 = vector.load %arg2[%c0, %c0_0] : memref<128x128xbf16, #tpu.memory_space<vmem>>, vector<128x128xbf16>
    %cst = arith.constant 0.000000e+00 : f32
    %1 = vector.broadcast %cst : f32 to vector<8x128xf32>
    %c0_i32 = arith.constant 0 : i32
    %2 = arith.index_cast %c0_i32 : i32 to index
    %c0_1 = arith.constant 0 : index
    %c0_2 = arith.constant 0 : index
    %3 = vector.load %arg1[%2, %c0_1, %c0_2] : memref<8x8x128xf32, #tpu.memory_space<vmem>>, vector<1x8x128xf32>
    %4 = vector.shape_cast %3 : vector<1x8x128xf32> to vector<8x128xf32>
    %5 = arith.truncf %1 : vector<8x128xf32> to vector<8x128xbf16>
    %cst_3 = arith.constant dense<0.000000e+00> : vector<8x128xf32>
    %6 = tpu.matmul %5, %0, %cst_3 {dimension_numbers = #tpu.dot_dimension_numbers<[1], [0], [0], [1], [0, 0, 1, 1], [], []>} : vector<8x128xbf16>, vector<128x128xbf16>, vector<8x128xf32> -> vector<8x128xf32>
    %7 = arith.addf %4, %6 : vector<8x128xf32>
    %8 = math.tanh %7 : vector<8x128xf32>
    %c1_i32 = arith.constant 1 : i32
    %9 = arith.index_cast %c1_i32 : i32 to index
    %c0_4 = arith.constant 0 : index
    %c0_5 = arith.constant 0 : index
    %10 = vector.load %arg1[%9, %c0_4, %c0_5] : memref<8x8x128xf32, #tpu.memory_space<vmem>>, vector<1x8x128xf32>
    %11 = vector.shape_cast %10 : vector<1x8x128xf32> to vector<8x128xf32>
    %12 = arith.truncf %8 : vector<8x128xf32> to vector<8x128xbf16>
    %cst_6 = arith.constant dense<0.000000e+00> : vector<8x128xf32>
    %13 = tpu.matmul %12, %0, %cst_6 {dimension_numbers = #tpu.dot_dimension_numbers<[1], [0], [0], [1], [0, 0, 1, 1], [], []>} : vector<8x128xbf16>, vector<128x128xbf16>, vector<8x128xf32> -> vector<8x128xf32>
    %14 = arith.addf %11, %13 : vector<8x128xf32>
    %15 = math.tanh %14 : vector<8x128xf32>
    %c2_i32 = arith.constant 2 : i32
    %16 = arith.index_cast %c2_i32 : i32 to index
    %c0_7 = arith.constant 0 : index
    %c0_8 = arith.constant 0 : index
    %17 = vector.load %arg1[%16, %c0_7, %c0_8] : memref<8x8x128xf32, #tpu.memory_space<vmem>>, vector<1x8x128xf32>
    %18 = vector.shape_cast %17 : vector<1x8x128xf32> to vector<8x128xf32>
    %19 = arith.truncf %15 : vector<8x128xf32> to vector<8x128xbf16>
    %cst_9 = arith.constant dense<0.000000e+00> : vector<8x128xf32>
    %20 = tpu.matmul %19, %0, %cst_9 {dimension_numbers = #tpu.dot_dimension_numbers<[1], [0], [0], [1], [0, 0, 1, 1], [], []>} : vector<8x128xbf16>, vector<128x128xbf16>, vector<8x128xf32> -> vector<8x128xf32>
    %21 = arith.addf %18, %20 : vector<8x128xf32>
    %22 = math.tanh %21 : vector<8x128xf32>
    %c3_i32 = arith.constant 3 : i32
    %23 = arith.index_cast %c3_i32 : i32 to index
    %c0_10 = arith.constant 0 : index
    %c0_11 = arith.constant 0 : index
    %24 = vector.load %arg1[%23, %c0_10, %c0_11] : memref<8x8x128xf32, #tpu.memory_space<vmem>>, vector<1x8x128xf32>
    %25 = vector.shape_cast %24 : vector<1x8x128xf32> to vector<8x128xf32>
    %26 = arith.truncf %22 : vector<8x128xf32> to vector<8x128xbf16>
    %cst_12 = arith.constant dense<0.000000e+00> : vector<8x128xf32>
    %27 = tpu.matmul %26, %0, %cst_12 {dimension_numbers = #tpu.dot_dimension_numbers<[1], [0], [0], [1], [0, 0, 1, 1], [], []>} : vector<8x128xbf16>, vector<128x128xbf16>, vector<8x128xf32> -> vector<8x128xf32>
    %28 = arith.addf %25, %27 : vector<8x128xf32>
    %29 = math.tanh %28 : vector<8x128xf32>
    %c4_i32 = arith.constant 4 : i32
    %30 = arith.index_cast %c4_i32 : i32 to index
    %c0_13 = arith.constant 0 : index
    %c0_14 = arith.constant 0 : index
    %31 = vector.load %arg1[%30, %c0_13, %c0_14] : memref<8x8x128xf32, #tpu.memory_space<vmem>>, vector<1x8x128xf32>
    %32 = vector.shape_cast %31 : vector<1x8x128xf32> to vector<8x128xf32>
    %33 = arith.truncf %29 : vector<8x128xf32> to vector<8x128xbf16>
    %cst_15 = arith.constant dense<0.000000e+00> : vector<8x128xf32>
    %34 = tpu.matmul %33, %0, %cst_15 {dimension_numbers = #tpu.dot_dimension_numbers<[1], [0], [0], [1], [0, 0, 1, 1], [], []>} : vector<8x128xbf16>, vector<128x128xbf16>, vector<8x128xf32> -> vector<8x128xf32>
    %35 = arith.addf %32, %34 : vector<8x128xf32>
    %36 = math.tanh %35 : vector<8x128xf32>
    %c5_i32 = arith.constant 5 : i32
    %37 = arith.index_cast %c5_i32 : i32 to index
    %c0_16 = arith.constant 0 : index
    %c0_17 = arith.constant 0 : index
    %38 = vector.load %arg1[%37, %c0_16, %c0_17] : memref<8x8x128xf32, #tpu.memory_space<vmem>>, vector<1x8x128xf32>
    %39 = vector.shape_cast %38 : vector<1x8x128xf32> to vector<8x128xf32>
    %40 = arith.truncf %36 : vector<8x128xf32> to vector<8x128xbf16>
    %cst_18 = arith.constant dense<0.000000e+00> : vector<8x128xf32>
    %41 = tpu.matmul %40, %0, %cst_18 {dimension_numbers = #tpu.dot_dimension_numbers<[1], [0], [0], [1], [0, 0, 1, 1], [], []>} : vector<8x128xbf16>, vector<128x128xbf16>, vector<8x128xf32> -> vector<8x128xf32>
    %42 = arith.addf %39, %41 : vector<8x128xf32>
    %43 = math.tanh %42 : vector<8x128xf32>
    %c6_i32 = arith.constant 6 : i32
    %44 = arith.index_cast %c6_i32 : i32 to index
    %c0_19 = arith.constant 0 : index
    %c0_20 = arith.constant 0 : index
    %45 = vector.load %arg1[%44, %c0_19, %c0_20] : memref<8x8x128xf32, #tpu.memory_space<vmem>>, vector<1x8x128xf32>
    %46 = vector.shape_cast %45 : vector<1x8x128xf32> to vector<8x128xf32>
    %47 = arith.truncf %43 : vector<8x128xf32> to vector<8x128xbf16>
    %cst_21 = arith.constant dense<0.000000e+00> : vector<8x128xf32>
    %48 = tpu.matmul %47, %0, %cst_21 {dimension_numbers = #tpu.dot_dimension_numbers<[1], [0], [0], [1], [0, 0, 1, 1], [], []>} : vector<8x128xbf16>, vector<128x128xbf16>, vector<8x128xf32> -> vector<8x128xf32>
    %49 = arith.addf %46, %48 : vector<8x128xf32>
    %50 = math.tanh %49 : vector<8x128xf32>
    %c7_i32 = arith.constant 7 : i32
    %51 = arith.index_cast %c7_i32 : i32 to index
    %c0_22 = arith.constant 0 : index
    %c0_23 = arith.constant 0 : index
    %52 = vector.load %arg1[%51, %c0_22, %c0_23] : memref<8x8x128xf32, #tpu.memory_space<vmem>>, vector<1x8x128xf32>
    %53 = vector.shape_cast %52 : vector<1x8x128xf32> to vector<8x128xf32>
    %54 = arith.truncf %50 : vector<8x128xf32> to vector<8x128xbf16>
    %cst_24 = arith.constant dense<0.000000e+00> : vector<8x128xf32>
    %55 = tpu.matmul %54, %0, %cst_24 {dimension_numbers = #tpu.dot_dimension_numbers<[1], [0], [0], [1], [0, 0, 1, 1], [], []>} : vector<8x128xbf16>, vector<128x128xbf16>, vector<8x128xf32> -> vector<8x128xf32>
    %56 = arith.addf %53, %55 : vector<8x128xf32>
    %57 = math.tanh %56 : vector<8x128xf32>
    %c8_i32 = arith.constant 8 : i32
    %c0_25 = arith.constant 0 : index
    %c0_26 = arith.constant 0 : index
    %58 = vector.load %arg3[%c0_25, %c0_26] : memref<128x128xf32, #tpu.memory_space<vmem>>, vector<128x128xf32>
    %cst_27 = arith.constant dense<0.000000e+00> : vector<8x128xf32>
    %59 = tpu.matmul %57, %58, %cst_27 {dimension_numbers = #tpu.dot_dimension_numbers<[1], [0], [0], [1], [0, 0, 1, 1], [], []>} : vector<8x128xf32>, vector<128x128xf32>, vector<8x128xf32> -> vector<8x128xf32>
    %c0_28 = arith.constant 0 : index
    %c0_29 = arith.constant 0 : index
    %60 = vector.load %arg4[%c0_28, %c0_29] : memref<1x128xf32, #tpu.memory_space<vmem>>, vector<1x128xf32>
    %61 = vector.broadcast %60 : vector<1x128xf32> to vector<8x128xf32>
    %62 = arith.addf %59, %61 : vector<8x128xf32>
    %c0_30 = arith.constant 0 : index
    %c0_31 = arith.constant 0 : index
    %63 = vector.load %arg5[%c0_30, %c0_31] : memref<8x128xf32, #tpu.memory_space<vmem>>, vector<8x128xf32>
    tpu.vector_store %arg5[%c0_30, %c0_31], %62 {strides = array<i32>} : memref<8x128xf32, #tpu.memory_space<vmem>>, vector<8x128xf32>,
    return
  }
  func.func @transform_0(%arg0: i32) -> (i32, i32, i32) {
    %c0_i32 = arith.constant 0 : i32
    %c0_i32_0 = arith.constant 0 : i32
    %c0_i32_1 = arith.constant 0 : i32
    return %c0_i32, %arg0, %c0_i32_0 : i32, i32, i32
  }
  func.func @transform_1(%arg0: i32) -> (i32, i32) {
    %c0_i32 = arith.constant 0 : i32
    %c0_i32_0 = arith.constant 0 : i32
    %c0_i32_1 = arith.constant 0 : i32
    return %c0_i32, %c0_i32_0 : i32, i32
  }
  func.func @transform_2(%arg0: i32) -> (i32, i32) {
    %c0_i32 = arith.constant 0 : i32
    %c0_i32_0 = arith.constant 0 : i32
    %c0_i32_1 = arith.constant 0 : i32
    return %c0_i32, %c0_i32_0 : i32, i32
  }
  func.func @transform_3(%arg0: i32) -> (i32, i32) {
    %c0_i32 = arith.constant 0 : i32
    %c0_i32_0 = arith.constant 0 : i32
    %c0_i32_1 = arith.constant 0 : i32
    return %c0_i32, %c0_i32_0 : i32, i32
  }
  func.func @transform_4(%arg0: i32) -> (i32, i32) {
    %c0_i32 = arith.constant 0 : i32
    %c0_i32_0 = arith.constant 0 : i32
    return %arg0, %c0_i32 : i32, i32
  }
}

</mosaic_0001>

<llo_original>
// kernel: tpu_custom_call.1
$region0: #{tpu_custom_call.1}
  #allocation0 [shape = 'u32[]', space=smem, size = 0x4, offset = 0x4, fixed_abs, tag = 'smem constant byte address 0x4 - core index']
  #allocation1 [shape = 'u32[144,128]{1,0:T(1,128)}', space=vmem, size = 0x12000, scoped, tag = 'internal scratch']
  %s0 = inlined_call_operand.hbm [shape: f32[8,8,128], index: 0, kind: input, shape index: {}]
  %s1 = inlined_call_operand.hbm [shape: bf16[128,128], index: 1, kind: input, shape index: {}]
  %s2 = inlined_call_operand.hbm [shape: f32[128,128], index: 2, kind: input, shape index: {}]
  %s3 = inlined_call_operand.vmem [shape: f32[1,128], index: 3, kind: input, shape index: {}]
  %s4 = inlined_call_operand.hbm [shape: f32[8,128], index: 4, kind: output, shape index: {}]
  %s5 = sld [smem:[#allocation0]]
  $region38: #{tpu_custom_call.1} parent=0
    _
  %s7 = ssub.s32 1, %s5
  %s8 = scalar_select 0, %s7, %s5
  $region1: #{tpu_custom_call.1} parent=0
    #allocation2 [shape = 'u8[32768]{0}', space=vmem, size = 0x8000, scoped, tag = 'input window, operand 0, single buffered']
    #allocation3 [shape = 's32[1]{0}', space=sflag, size = 0x4, scoped, tag = 'scoped memory for tpu_custom_call.1']
    #allocation4 [shape = 's32[1]{0}', space=sflag, size = 0x4, scoped, tag = 'scoped memory for tpu_custom_call.1']
    #allocation5 [shape = 'u8[32768]{0}', space=vmem, size = 0x8000, scoped, tag = 'input window, operand 1, single buffered']
    #allocation6 [shape = 's32[1]{0}', space=sflag, size = 0x4, scoped, tag = 'scoped memory for tpu_custom_call.1']
    #allocation7 [shape = 'u8[65536]{0}', space=vmem, size = 0x10000, scoped, tag = 'input window, operand 2, single buffered']
    #allocation8 [shape = 'u8[4096]{0}', space=vmem, size = 0x1000, scoped, tag = 'output window, operand 0, single buffered']
    %9 = vsyncpa [#allocation3], 0
    %10 = vsyncpa [#allocation6], 0
    %11 = vsyncpa [#allocation4], 0
    // Predicated region
    $region2: #{tpu_custom_call.1} parent=1 // pred_check
      _
    $region3: #{tpu_custom_call.1} parent=1 // pred_check_branch
      %13 = sbr.rel (0) target = $region5
    $region4: #{tpu_custom_call.1} parent=1 // pred_region
      %s15 = ssub.s32 1024, 1024
      %16 = vsyncadd [#allocation3], %s15
      %s17 = sshll.u32 [#allocation2], 4
      %s18 = int_to_ptr.vmem [resolvable:$true] %s17
      %23 = dma.hbm_to_vmem [thread:$0]  %s0, 1024, %s18, [#allocation3], 128, 128, 8
    $region5: #{tpu_custom_call.1} parent=1 // pred_fallthru
      _
    // Predicated region
    $region6: #{tpu_custom_call.1} parent=1 // pred_check
      _
    $region7: #{tpu_custom_call.1} parent=1 // pred_check_branch
      %25 = sbr.rel (0) target = $region9
    $region8: #{tpu_custom_call.1} parent=1 // pred_region
      %s27 = ssub.s32 1024, 1024
      %28 = vsyncadd [#allocation6], %s27
      %s29 = sshll.u32 [#allocation5], 4
      %s30 = int_to_ptr.vmem [resolvable:$true] %s29
      %35 = dma.hbm_to_vmem [thread:$0]  %s1, 1024, %s30, [#allocation6], 64, 64, 4
    $region9: #{tpu_custom_call.1} parent=1 // pred_fallthru
      _
    // Predicated region
    $region10: #{tpu_custom_call.1} parent=1 // pred_check
      _
    $region11: #{tpu_custom_call.1} parent=1 // pred_check_branch
      %37 = sbr.rel (0) target = $region13
    $region12: #{tpu_custom_call.1} parent=1 // pred_region
      %s39 = ssub.s32 2048, 2048
      %40 = vsyncadd [#allocation6], %s39
      %s41 = sshll.u32 [#allocation7], 4
      %s42 = int_to_ptr.vmem [resolvable:$true] %s41
      %47 = dma.hbm_to_vmem [thread:$0]  %s2, 2048, %s42, [#allocation6], 128, 128, 8
    $region13: #{tpu_custom_call.1} parent=1 // pred_fallthru
      _
    // Predicated region
    $region14: #{tpu_custom_call.1} parent=1 // pred_check
      _
    $region15: #{tpu_custom_call.1} parent=1 // pred_check_branch
      %49 = sbr.rel (0) target = $region17
    $region16: #{tpu_custom_call.1} parent=1 // pred_region
      _
    $region17: #{tpu_custom_call.1} parent=1 // pred_fallthru
      _
    // Predicated region
    $region18: #{tpu_custom_call.1} parent=1 // pred_check
      _
    $region19: #{tpu_custom_call.1} parent=1 // pred_check_branch
      %51 = sbr.rel (0) target = $region21
    $region20: #{tpu_custom_call.1} parent=1 // pred_region
      %52 = dma.done [#allocation3], 1024
    $region21: #{tpu_custom_call.1} parent=1 // pred_fallthru
      _
    // Predicated region
    $region22: #{tpu_custom_call.1} parent=1 // pred_check
      _
    $region23: #{tpu_custom_call.1} parent=1 // pred_check_branch
      %54 = sbr.rel (0) target = $region25
    $region24: #{tpu_custom_call.1} parent=1 // pred_region
      %55 = dma.done [#allocation6], 1024
    $region25: #{tpu_custom_call.1} parent=1 // pred_fallthru
      _
    // Predicated region
    $region26: #{tpu_custom_call.1} parent=1 // pred_check
      _
    $region27: #{tpu_custom_call.1} parent=1 // pred_check_branch
      %57 = sbr.rel (0) target = $region29
    $region28: #{tpu_custom_call.1} parent=1 // pred_region
      %58 = dma.done [#allocation6], 2048
    $region29: #{tpu_custom_call.1} parent=1 // pred_fallthru
      _
    %v60 = vld [vmem:[#allocation5] sm:$0xf]
    %v61 = vld [vmem:[#allocation5 + $0x4] sm:$0xf]
    %v62 = vld [vmem:[#allocation5 + $0x8] sm:$0xf]
    %v63 = vld [vmem:[#allocation5 + $0xc] sm:$0xf]
    %v64 = vld [vmem:[#allocation5 + $0x10] sm:$0xf]
    %v65 = vld [vmem:[#allocation5 + $0x14] sm:$0xf]
    %v66 = vld [vmem:[#allocation5 + $0x18] sm:$0xf]
    %v67 = vld [vmem:[#allocation5 + $0x1c] sm:$0xf]
    %v68 = vld [vmem:[#allocation5 + $0x20] sm:$0xf]
    %v69 = vld [vmem:[#allocation5 + $0x24] sm:$0xf]
    %v70 = vld [vmem:[#allocation5 + $0x28] sm:$0xf]
    %v71 = vld [vmem:[#allocation5 + $0x2c] sm:$0xf]
    %v72 = vld [vmem:[#allocation5 + $0x30] sm:$0xf]
    %v73 = vld [vmem:[#allocation5 + $0x34] sm:$0xf]
    %v74 = vld [vmem:[#allocation5 + $0x38] sm:$0xf]
    %v75 = vld [vmem:[#allocation5 + $0x3c] sm:$0xf]
    %v76 = vld [vmem:[#allocation2] sm:$0xff]
    %v93 = vunpack.c.l.b16 %v60
    %v94 = vunpack.c.l.b16 %v61
    %v95 = vunpack.c.l.b16 %v62
    %v96 = vunpack.c.l.b16 %v63
    %v97 = vunpack.c.l.b16 %v64
    %v98 = vunpack.c.l.b16 %v65
    %v99 = vunpack.c.l.b16 %v66
    %v100 = vunpack.c.l.b16 %v67
    %v101 = vunpack.c.l.b16 %v68
    %v102 = vunpack.c.l.b16 %v69
    %v103 = vunpack.c.l.b16 %v70
    %v104 = vunpack.c.l.b16 %v71
    %v105 = vunpack.c.l.b16 %v72
    %v106 = vunpack.c.l.b16 %v73
    %v107 = vunpack.c.l.b16 %v74
    %v108 = vunpack.c.l.b16 %v75
    %v109 = vpack.c.b16 %v94, %v93
    %v110 = vpack.c.b16 %v96, %v95
    %v111 = vpack.c.b16 %v98, %v97
    %v112 = vpack.c.b16 %v100, %v99
    %v113 = vpack.c.b16 %v102, %v101
    %v114 = vpack.c.b16 %v104, %v103
    %v115 = vpack.c.b16 %v106, %v105
    %v116 = vpack.c.b16 %v108, %v107
    %125 = vmatprep.subr.bf16.mxu0 0
    %126 = vmatpush1.bf16.msra.mxu0 %v116
    %127 = vmatprep.subr.bf16.mxu0 0
    %128 = vmatpush1.bf16.msra.mxu0 %v115
    %129 = vmatprep.subr.bf16.mxu0 0
    %130 = vmatpush1.bf16.msra.mxu0 %v114
    %131 = vmatprep.subr.bf16.mxu0 0
    %132 = vmatpush1.bf16.msra.mxu0 %v113
    %133 = vmatprep.subr.bf16.mxu0 0
    %134 = vmatpush1.bf16.msra.mxu0 %v112
    %135 = vmatprep.subr.bf16.mxu0 0
    %136 = vmatpush1.bf16.msra.mxu0 %v111
    %137 = vmatprep.subr.bf16.mxu0 0
    %138 = vmatpush1.bf16.msra.mxu0 %v110
    %139 = vmatprep.subr.bf16.mxu0 0
    %140 = vmatpush1.bf16.msra.mxu0 %v109
    %141 = vmatprep.subr.bf16.mxu0 0
    %142 = vmatpush2.bf16.msra.mxu0 0
    %143 = vmatprep.subr.bf16.mxu0 0
    %144 = vmatpush2.bf16.msra.mxu0 0
    %145 = vmatprep.subr.bf16.mxu0 0
    %146 = vmatpush2.bf16.msra.mxu0 0
    %147 = vmatprep.subr.bf16.mxu0 0
    %148 = vmatpush2.bf16.msra.mxu0 0
    %149 = vmatprep.subr.bf16.mxu0 0
    %150 = vmatpush2.bf16.msra.mxu0 0
    %151 = vmatprep.subr.bf16.mxu0 0
    %152 = vmatpush2.bf16.msra.mxu0 0
    %153 = vmatprep.subr.bf16.mxu0 0
    %154 = vmatpush2.bf16.msra.mxu0 0
    %155 = vmatprep.subr.bf16.mxu0 0
    %156 = vmatpush2.bf16.msra.mxu0 0
    %157 = vmatprep.mubr.bf16.mxu0 0
    %158 = vmatmul.mubr.bf16.gmra.mxu0 0
    %v159 = vpop.f32.mrf.mxu0
    %v160 = vadd.f32 0.0, %v159
    %v161 = vpop.f32.mrf.mxu0
    %v162 = vpop.f32.mrf.mxu0
    %v163 = vpop.f32.mrf.mxu0
    %164 = vdwg.mxu0
    %v165 = vadd.f32 %v76, %v160
    %v166 = vtanh.pop %v165
    %s167 = scalar_lea.vmem [#allocation2], 8
    %v168 = vld [vmem:[%s167] sm:$0xff]
    %v169 = vpack.c.bf16 %v166, %v166
    %170 = vmatprep.subr.bf16.mxu0 0
    %171 = vmatpush1.bf16.msra.mxu0 %v116
    %172 = vmatprep.subr.bf16.mxu0 0
    %173 = vmatpush1.bf16.msra.mxu0 %v115
    %174 = vmatprep.subr.bf16.mxu0 0
    %175 = vmatpush1.bf16.msra.mxu0 %v114
    %176 = vmatprep.subr.bf16.mxu0 0
    %177 = vmatpush1.bf16.msra.mxu0 %v113
    %178 = vmatprep.subr.bf16.mxu0 0
    %179 = vmatpush1.bf16.msra.mxu0 %v112
    %180 = vmatprep.subr.bf16.mxu0 0
    %181 = vmatpush1.bf16.msra.mxu0 %v111
    %182 = vmatprep.subr.bf16.mxu0 0
    %183 = vmatpush1.bf16.msra.mxu0 %v110
    %184 = vmatprep.subr.bf16.mxu0 0
    %185 = vmatpush1.bf16.msra.mxu0 %v109
    %186 = vmatprep.subr.bf16.mxu0 0
    %187 = vmatpush2.bf16.msra.mxu0 0
    %188 = vmatprep.subr.bf16.mxu0 0
    %189 = vmatpush2.bf16.msra.mxu0 0
    %190 = vmatprep.subr.bf16.mxu0 0
    %191 = vmatpush2.bf16.msra.mxu0 0
    %192 = vmatprep.subr.bf16.mxu0 0
    %193 = vmatpush2.bf16.msra.mxu0 0
    %194 = vmatprep.subr.bf16.mxu0 0
    %195 = vmatpush2.bf16.msra.mxu0 0
    %196 = vmatprep.subr.bf16.mxu0 0
    %197 = vmatpush2.bf16.msra.mxu0 0
    %198 = vmatprep.subr.bf16.mxu0 0
    %199 = vmatpush2.bf16.msra.mxu0 0
    %200 = vmatprep.subr.bf16.mxu0 0
    %201 = vmatpush2.bf16.msra.mxu0 0
    %202 = vmatprep.mubr.bf16.mxu0 0
    %203 = vmatmul.mubr.bf16.gmra.mxu0 %v169
    %v204 = vpop.f32.mrf.mxu0
    %v205 = vadd.f32 0.0, %v204
    %v206 = vpop.f32.mrf.mxu0
    %v207 = vpop.f32.mrf.mxu0
    %v208 = vpop.f32.mrf.mxu0
    %209 = vdwg.mxu0
    %v210 = vadd.f32 %v168, %v205
    %v211 = vtanh.pop %v210
    %s212 = scalar_lea.vmem [#allocation2], 16
    %v213 = vld [vmem:[%s212] sm:$0xff]
    %v214 = vpack.c.bf16 %v211, %v211
    %215 = vmatprep.subr.bf16.mxu0 0
    %216 = vmatpush1.bf16.msra.mxu0 %v116
    %217 = vmatprep.subr.bf16.mxu0 0
    %218 = vmatpush1.bf16.msra.mxu0 %v115
    %219 = vmatprep.subr.bf16.mxu0 0
    %220 = vmatpush1.bf16.msra.mxu0 %v114
    %221 = vmatprep.subr.bf16.mxu0 0
    %222 = vmatpush1.bf16.msra.mxu0 %v113
    %223 = vmatprep.subr.bf16.mxu0 0
    %224 = vmatpush1.bf16.msra.mxu0 %v112
    %225 = vmatprep.subr.bf16.mxu0 0
    %226 = vmatpush1.bf16.msra.mxu0 %v111
    %227 = vmatprep.subr.bf16.mxu0 0
    %228 = vmatpush1.bf16.msra.mxu0 %v110
    %229 = vmatprep.subr.bf16.mxu0 0
    %230 = vmatpush1.bf16.msra.mxu0 %v109
    %231 = vmatprep.subr.bf16.mxu0 0
    %232 = vmatpush2.bf16.msra.mxu0 0
    %233 = vmatprep.subr.bf16.mxu0 0
    %234 = vmatpush2.bf16.msra.mxu0 0
    %235 = vmatprep.subr.bf16.mxu0 0
    %236 = vmatpush2.bf16.msra.mxu0 0
    %237 = vmatprep.subr.bf16.mxu0 0
    %238 = vmatpush2.bf16.msra.mxu0 0
    %239 = vmatprep.subr.bf16.mxu0 0
    %240 = vmatpush2.bf16.msra.mxu0 0
    %241 = vmatprep.subr.bf16.mxu0 0
    %242 = vmatpush2.bf16.msra.mxu0 0
    %243 = vmatprep.subr.bf16.mxu0 0
    %244 = vmatpush2.bf16.msra.mxu0 0
    %245 = vmatprep.subr.bf16.mxu0 0
    %246 = vmatpush2.bf16.msra.mxu0 0
    %247 = vmatprep.mubr.bf16.mxu0 0
    %248 = vmatmul.mubr.bf16.gmra.mxu0 %v214
    %v249 = vpop.f32.mrf.mxu0
    %v250 = vadd.f32 0.0, %v249
    %v251 = vpop.f32.mrf.mxu0
    %v252 = vpop.f32.mrf.mxu0
    %v253 = vpop.f32.mrf.mxu0
    %254 = vdwg.mxu0
    %v255 = vadd.f32 %v213, %v250
    %v256 = vtanh.pop %v255
    %s257 = scalar_lea.vmem [#allocation2], 24
    %v258 = vld [vmem:[%s257] sm:$0xff]
    %v259 = vpack.c.bf16 %v256, %v256
    %260 = vmatprep.subr.bf16.mxu0 0
    %261 = vmatpush1.bf16.msra.mxu0 %v116
    %262 = vmatprep.subr.bf16.mxu0 0
    %263 = vmatpush1.bf16.msra.mxu0 %v115
    %264 = vmatprep.subr.bf16.mxu0 0
    %265 = vmatpush1.bf16.msra.mxu0 %v114
    %266 = vmatprep.subr.bf16.mxu0 0
    %267 = vmatpush1.bf16.msra.mxu0 %v113
    %268 = vmatprep.subr.bf16.mxu0 0
    %269 = vmatpush1.bf16.msra.mxu0 %v112
    %270 = vmatprep.subr.bf16.mxu0 0
    %271 = vmatpush1.bf16.msra.mxu0 %v111
    %272 = vmatprep.subr.bf16.mxu0 0
    %273 = vmatpush1.bf16.msra.mxu0 %v110
    %274 = vmatprep.subr.bf16.mxu0 0
    %275 = vmatpush1.bf16.msra.mxu0 %v109
    %276 = vmatprep.subr.bf16.mxu0 0
    %277 = vmatpush2.bf16.msra.mxu0 0
    %278 = vmatprep.subr.bf16.mxu0 0
    %279 = vmatpush2.bf16.msra.mxu0 0
    %280 = vmatprep.subr.bf16.mxu0 0
    %281 = vmatpush2.bf16.msra.mxu0 0
    %282 = vmatprep.subr.bf16.mxu0 0
    %283 = vmatpush2.bf16.msra.mxu0 0
    %284 = vmatprep.subr.bf16.mxu0 0
    %285 = vmatpush2.bf16.msra.mxu0 0
    %286 = vmatprep.subr.bf16.mxu0 0
    %287 = vmatpush2.bf16.msra.mxu0 0
    %288 = vmatprep.subr.bf16.mxu0 0
    %289 = vmatpush2.bf16.msra.mxu0 0
    %290 = vmatprep.subr.bf16.mxu0 0
    %291 = vmatpush2.bf16.msra.mxu0 0
    %292 = vmatprep.mubr.bf16.mxu0 0
    %293 = vmatmul.mubr.bf16.gmra.mxu0 %v259
    %v294 = vpop.f32.mrf.mxu0
    %v295 = vadd.f32 0.0, %v294
    %v296 = vpop.f32.mrf.mxu0
    %v297 = vpop.f32.mrf.mxu0
    %v298 = vpop.f32.mrf.mxu0
    %299 = vdwg.mxu0
    %v300 = vadd.f32 %v258, %v295
    %v301 = vtanh.pop %v300
    %s302 = scalar_lea.vmem [#allocation2], 32
    %v303 = vld [vmem:[%s302] sm:$0xff]
    %v304 = vpack.c.bf16 %v301, %v301
    %305 = vmatprep.subr.bf16.mxu0 0
    %306 = vmatpush1.bf16.msra.mxu0 %v116
    %307 = vmatprep.subr.bf16.mxu0 0
    %308 = vmatpush1.bf16.msra.mxu0 %v115
    %309 = vmatprep.subr.bf16.mxu0 0
    %310 = vmatpush1.bf16.msra.mxu0 %v114
    %311 = vmatprep.subr.bf16.mxu0 0
    %312 = vmatpush1.bf16.msra.mxu0 %v113
    %313 = vmatprep.subr.bf16.mxu0 0
    %314 = vmatpush1.bf16.msra.mxu0 %v112
    %315 = vmatprep.subr.bf16.mxu0 0
    %316 = vmatpush1.bf16.msra.mxu0 %v111
    %317 = vmatprep.subr.bf16.mxu0 0
    %318 = vmatpush1.bf16.msra.mxu0 %v110
    %319 = vmatprep.subr.bf16.mxu0 0
    %320 = vmatpush1.bf16.msra.mxu0 %v109
    %321 = vmatprep.subr.bf16.mxu0 0
    %322 = vmatpush2.bf16.msra.mxu0 0
    %323 = vmatprep.subr.bf16.mxu0 0
    %324 = vmatpush2.bf16.msra.mxu0 0
    %325 = vmatprep.subr.bf16.mxu0 0
    %326 = vmatpush2.bf16.msra.mxu0 0
    %327 = vmatprep.subr.bf16.mxu0 0
    %328 = vmatpush2.bf16.msra.mxu0 0
    %329 = vmatprep.subr.bf16.mxu0 0
    %330 = vmatpush2.bf16.msra.mxu0 0
    %331 = vmatprep.subr.bf16.mxu0 0
    %332 = vmatpush2.bf16.msra.mxu0 0
    %333 = vmatprep.subr.bf16.mxu0 0
    %334 = vmatpush2.bf16.msra.mxu0 0
    %335 = vmatprep.subr.bf16.mxu0 0
    %336 = vmatpush2.bf16.msra.mxu0 0
    %337 = vmatprep.mubr.bf16.mxu0 0
    %338 = vmatmul.mubr.bf16.gmra.mxu0 %v304
    %v339 = vpop.f32.mrf.mxu0
    %v340 = vadd.f32 0.0, %v339
    %v341 = vpop.f32.mrf.mxu0
    %v342 = vpop.f32.mrf.mxu0
    %v343 = vpop.f32.mrf.mxu0
    %344 = vdwg.mxu0
    %v345 = vadd.f32 %v303, %v340
    %v346 = vtanh.pop %v345
    %s347 = scalar_lea.vmem [#allocation2], 40
    %v348 = vld [vmem:[%s347] sm:$0xff]
    %v349 = vpack.c.bf16 %v346, %v346
    %350 = vmatprep.subr.bf16.mxu0 0
    %351 = vmatpush1.bf16.msra.mxu0 %v116
    %352 = vmatprep.subr.bf16.mxu0 0
    %353 = vmatpush1.bf16.msra.mxu0 %v115
    %354 = vmatprep.subr.bf16.mxu0 0
    %355 = vmatpush1.bf16.msra.mxu0 %v114
    %356 = vmatprep.subr.bf16.mxu0 0
    %357 = vmatpush1.bf16.msra.mxu0 %v113
    %358 = vmatprep.subr.bf16.mxu0 0
    %359 = vmatpush1.bf16.msra.mxu0 %v112
    %360 = vmatprep.subr.bf16.mxu0 0
    %361 = vmatpush1.bf16.msra.mxu0 %v111
    %362 = vmatprep.subr.bf16.mxu0 0
    %363 = vmatpush1.bf16.msra.mxu0 %v110
    %364 = vmatprep.subr.bf16.mxu0 0
    %365 = vmatpush1.bf16.msra.mxu0 %v109
    %366 = vmatprep.subr.bf16.mxu0 0
    %367 = vmatpush2.bf16.msra.mxu0 0
    %368 = vmatprep.subr.bf16.mxu0 0
    %369 = vmatpush2.bf16.msra.mxu0 0
    %370 = vmatprep.subr.bf16.mxu0 0
    %371 = vmatpush2.bf16.msra.mxu0 0
    %372 = vmatprep.subr.bf16.mxu0 0
    %373 = vmatpush2.bf16.msra.mxu0 0
    %374 = vmatprep.subr.bf16.mxu0 0
    %375 = vmatpush2.bf16.msra.mxu0 0
    %376 = vmatprep.subr.bf16.mxu0 0
    %377 = vmatpush2.bf16.msra.mxu0 0
    %378 = vmatprep.subr.bf16.mxu0 0
    %379 = vmatpush2.bf16.msra.mxu0 0
    %380 = vmatprep.subr.bf16.mxu0 0
    %381 = vmatpush2.bf16.msra.mxu0 0
    %382 = vmatprep.mubr.bf16.mxu0 0
    %383 = vmatmul.mubr.bf16.gmra.mxu0 %v349
    %v384 = vpop.f32.mrf.mxu0
    %v385 = vadd.f32 0.0, %v384
    %v386 = vpop.f32.mrf.mxu0
    %v387 = vpop.f32.mrf.mxu0
    %v388 = vpop.f32.mrf.mxu0
    %389 = vdwg.mxu0
    %v390 = vadd.f32 %v348, %v385
    %v391 = vtanh.pop %v390
    %s392 = scalar_lea.vmem [#allocation2], 48
    %v393 = vld [vmem:[%s392] sm:$0xff]
    %v394 = vpack.c.bf16 %v391, %v391
    %395 = vmatprep.subr.bf16.mxu0 0
    %396 = vmatpush1.bf16.msra.mxu0 %v116
    %397 = vmatprep.subr.bf16.mxu0 0
    %398 = vmatpush1.bf16.msra.mxu0 %v115
    %399 = vmatprep.subr.bf16.mxu0 0
    %400 = vmatpush1.bf16.msra.mxu0 %v114
    %401 = vmatprep.subr.bf16.mxu0 0
    %402 = vmatpush1.bf16.msra.mxu0 %v113
    %403 = vmatprep.subr.bf16.mxu0 0
    %404 = vmatpush1.bf16.msra.mxu0 %v112
    %405 = vmatprep.subr.bf16.mxu0 0
    %406 = vmatpush1.bf16.msra.mxu0 %v111
    %407 = vmatprep.subr.bf16.mxu0 0
    %408 = vmatpush1.bf16.msra.mxu0 %v110
    %409 = vmatprep.subr.bf16.mxu0 0
    %410 = vmatpush1.bf16.msra.mxu0 %v109
    %411 = vmatprep.subr.bf16.mxu0 0
    %412 = vmatpush2.bf16.msra.mxu0 0
    %413 = vmatprep.subr.bf16.mxu0 0
    %414 = vmatpush2.bf16.msra.mxu0 0
    %415 = vmatprep.subr.bf16.mxu0 0
    %416 = vmatpush2.bf16.msra.mxu0 0
    %417 = vmatprep.subr.bf16.mxu0 0
    %418 = vmatpush2.bf16.msra.mxu0 0
    %419 = vmatprep.subr.bf16.mxu0 0
    %420 = vmatpush2.bf16.msra.mxu0 0
    %421 = vmatprep.subr.bf16.mxu0 0
    %422 = vmatpush2.bf16.msra.mxu0 0
    %423 = vmatprep.subr.bf16.mxu0 0
    %424 = vmatpush2.bf16.msra.mxu0 0
    %425 = vmatprep.subr.bf16.mxu0 0
    %426 = vmatpush2.bf16.msra.mxu0 0
    %427 = vmatprep.mubr.bf16.mxu0 0
    %428 = vmatmul.mubr.bf16.gmra.mxu0 %v394
    %v429 = vpop.f32.mrf.mxu0
    %v430 = vadd.f32 0.0, %v429
    %v431 = vpop.f32.mrf.mxu0
    %v432 = vpop.f32.mrf.mxu0
    %v433 = vpop.f32.mrf.mxu0
    %434 = vdwg.mxu0
    %v435 = vadd.f32 %v393, %v430
    %v436 = vtanh.pop %v435
    %s437 = scalar_lea.vmem [#allocation2], 56
    %v438 = vld [vmem:[%s437] sm:$0xff]
    %v439 = vpack.c.bf16 %v436, %v436
    %440 = vmatprep.subr.bf16.mxu0 0
    %441 = vmatpush1.bf16.msra.mxu0 %v116
    %442 = vmatprep.subr.bf16.mxu0 0
    %443 = vmatpush1.bf16.msra.mxu0 %v115
    %444 = vmatprep.subr.bf16.mxu0 0
    %445 = vmatpush1.bf16.msra.mxu0 %v114
    %446 = vmatprep.subr.bf16.mxu0 0
    %447 = vmatpush1.bf16.msra.mxu0 %v113
    %448 = vmatprep.subr.bf16.mxu0 0
    %449 = vmatpush1.bf16.msra.mxu0 %v112
    %450 = vmatprep.subr.bf16.mxu0 0
    %451 = vmatpush1.bf16.msra.mxu0 %v111
    %452 = vmatprep.subr.bf16.mxu0 0
    %453 = vmatpush1.bf16.msra.mxu0 %v110
    %454 = vmatprep.subr.bf16.mxu0 0
    %455 = vmatpush1.bf16.msra.mxu0 %v109
    %456 = vmatprep.subr.bf16.mxu0 0
    %457 = vmatpush2.bf16.msra.mxu0 0
    %458 = vmatprep.subr.bf16.mxu0 0
    %459 = vmatpush2.bf16.msra.mxu0 0
    %460 = vmatprep.subr.bf16.mxu0 0
    %461 = vmatpush2.bf16.msra.mxu0 0
    %462 = vmatprep.subr.bf16.mxu0 0
    %463 = vmatpush2.bf16.msra.mxu0 0
    %464 = vmatprep.subr.bf16.mxu0 0
    %465 = vmatpush2.bf16.msra.mxu0 0
    %466 = vmatprep.subr.bf16.mxu0 0
    %467 = vmatpush2.bf16.msra.mxu0 0
    %468 = vmatprep.subr.bf16.mxu0 0
    %469 = vmatpush2.bf16.msra.mxu0 0
    %470 = vmatprep.subr.bf16.mxu0 0
    %471 = vmatpush2.bf16.msra.mxu0 0
    %472 = vmatprep.mubr.bf16.mxu0 0
    %473 = vmatmul.mubr.bf16.gmra.mxu0 %v439
    %v474 = vpop.f32.mrf.mxu0
    %v475 = vadd.f32 0.0, %v474
    %v476 = vpop.f32.mrf.mxu0
    %v477 = vpop.f32.mrf.mxu0
    %v478 = vpop.f32.mrf.mxu0
    %479 = vdwg.mxu0
    %v480 = vadd.f32 %v438, %v475
    %v481 = vtanh.pop %v480
    %v482 = vld [vmem:[#allocation7] sm:$0xff]
    %v483 = vld [vmem:[#allocation7 + $0x8] sm:$0xff]
    %v484 = vld [vmem:[#allocation7 + $0x10] sm:$0xff]
    %v485 = vld [vmem:[#allocation7 + $0x18] sm:$0xff]
    %v486 = vld [vmem:[#allocation7 + $0x20] sm:$0xff]
    %v487 = vld [vmem:[#allocation7 + $0x28] sm:$0xff]
    %v488 = vld [vmem:[#allocation7 + $0x30] sm:$0xff]
    %v489 = vld [vmem:[#allocation7 + $0x38] sm:$0xff]
    %v490 = vld [vmem:[#allocation7 + $0x40] sm:$0xff]
    %v491 = vld [vmem:[#allocation7 + $0x48] sm:$0xff]
    %v492 = vld [vmem:[#allocation7 + $0x50] sm:$0xff]
    %v493 = vld [vmem:[#allocation7 + $0x58] sm:$0xff]
    %v494 = vld [vmem:[#allocation7 + $0x60] sm:$0xff]
    %v495 = vld [vmem:[#allocation7 + $0x68] sm:$0xff]
    %v496 = vld [vmem:[#allocation7 + $0x70] sm:$0xff]
    %v497 = vld [vmem:[#allocation7 + $0x78] sm:$0xff]
    %v498 = vld [vmem:[%s3] sm:$0x1]
    %v500 = vlaneseq
    %v501 = vshrl.u32 %v500, 7
    %v502 = vsub.s32 0, %v501
    %v503 = vrot.slane %v498, %v502
    %505 = vmatprep.subr.mxu0 0.0
    %506 = vmatpush1.msra.mxu0 %v497
    %507 = vmatprep.subr.mxu0 0.0
    %508 = vmatpush1.msra.mxu0 %v496
    %509 = vmatprep.subr.mxu0 0.0
    %510 = vmatpush1.msra.mxu0 %v495
    %511 = vmatprep.subr.mxu0 0.0
    %512 = vmatpush1.msra.mxu0 %v494
    %513 = vmatprep.subr.mxu0 0.0
    %514 = vmatpush1.msra.mxu0 %v493
    %515 = vmatprep.subr.mxu0 0.0
    %516 = vmatpush1.msra.mxu0 %v492
    %517 = vmatprep.subr.mxu0 0.0
    %518 = vmatpush1.msra.mxu0 %v491
    %519 = vmatprep.subr.mxu0 0.0
    %520 = vmatpush1.msra.mxu0 %v490
    %521 = vmatprep.subr.mxu0 0.0
    %522 = vmatpush1.msra.mxu0 %v489
    %523 = vmatprep.subr.mxu0 0.0
    %524 = vmatpush1.msra.mxu0 %v488
    %525 = vmatprep.subr.mxu0 0.0
    %526 = vmatpush1.msra.mxu0 %v487
    %527 = vmatprep.subr.mxu0 0.0
    %528 = vmatpush1.msra.mxu0 %v486
    %529 = vmatprep.subr.mxu0 0.0
    %530 = vmatpush1.msra.mxu0 %v485
    %531 = vmatprep.subr.mxu0 0.0
    %532 = vmatpush1.msra.mxu0 %v484
    %533 = vmatprep.subr.mxu0 0.0
    %534 = vmatpush1.msra.mxu0 %v483
    %535 = vmatprep.subr.mxu0 0.0
    %536 = vmatpush1.msra.mxu0 %v482
    %537 = vmatprep.subr.mxu0 0.0
    %538 = vmatpush2.msra.mxu0 0.0
    %539 = vmatprep.subr.mxu0 0.0
    %540 = vmatpush2.msra.mxu0 0.0
    %541 = vmatprep.subr.mxu0 0.0
    %542 = vmatpush2.msra.mxu0 0.0
    %543 = vmatprep.subr.mxu0 0.0
    %544 = vmatpush2.msra.mxu0 0.0
    %545 = vmatprep.subr.mxu0 0.0
    %546 = vmatpush2.msra.mxu0 0.0
    %547 = vmatprep.subr.mxu0 0.0
    %548 = vmatpush2.msra.mxu0 0.0
    %549 = vmatprep.subr.mxu0 0.0
    %550 = vmatpush2.msra.mxu0 0.0
    %551 = vmatprep.subr.mxu0 0.0
    %552 = vmatpush2.msra.mxu0 0.0
    %553 = vmatprep.subr.mxu0 0.0
    %554 = vmatpush2.msra.mxu0 0.0
    %555 = vmatprep.subr.mxu0 0.0
    %556 = vmatpush2.msra.mxu0 0.0
    %557 = vmatprep.subr.mxu0 0.0
    %558 = vmatpush2.msra.mxu0 0.0
    %559 = vmatprep.subr.mxu0 0.0
    %560 = vmatpush2.msra.mxu0 0.0
    %561 = vmatprep.subr.mxu0 0.0
    %562 = vmatpush2.msra.mxu0 0.0
    %563 = vmatprep.subr.mxu0 0.0
    %564 = vmatpush2.msra.mxu0 0.0
    %565 = vmatprep.subr.mxu0 0.0
    %566 = vmatpush2.msra.mxu0 0.0
    %567 = vmatprep.subr.mxu0 0.0
    %568 = vmatpush2.msra.mxu0 0.0
    %569 = vmatprep.mubr.f32.mxu0 0.0
    %570 = vmatmul.mubr.f32.gmra.mxu0 %v481
    %v571 = vpop.f32.mrf.mxu0
    %v572 = vadd.f32 %v503, %v571
    %v573 = vpop.f32.mrf.mxu0
    %574 = vdwg.mxu0
    %575 = vst [vmem:[#allocation8] sm:$0xff] %v572
    // Predicated region
    $region30: #{tpu_custom_call.1} parent=1 // pred_check
      _
    $region31: #{tpu_custom_call.1} parent=1 // pred_check_branch
      %577 = sbr.rel (0) target = $region33
    $region32: #{tpu_custom_call.1} parent=1 // pred_region
      %s579 = ssub.s32 128, 128
      %580 = vsyncadd [#allocation4], %s579
      %s582 = sshll.u32 [#allocation8], 4
      %s583 = int_to_ptr.vmem [resolvable:$true] %s582
      %585 = dma.vmem_to_hbm [thread:$0]  %s583, 128, %s4, [#allocation4]
    $region33: #{tpu_custom_call.1} parent=1 // pred_fallthru
      _
    // Predicated region
    $region34: #{tpu_custom_call.1} parent=1 // pred_check
      _
    $region35: #{tpu_custom_call.1} parent=1 // pred_check_branch
      %587 = sbr.rel (0) target = $region37
    $region36: #{tpu_custom_call.1} parent=1 // pred_region
      %588 = dma.done [#allocation4], 128
    $region37: #{tpu_custom_call.1} parent=1 // pred_fallthru
      _
    %589 = vsyncpa [#allocation3], 1
    %590 = vsyncpa [#allocation6], 1
    %591 = vsyncpa [#allocation4], 1

</llo_original>
